<compile_context>
chip_gen: v6e
topology: v6e:2x2x1
jax: 0.10.0
libtpu: 0.0.40
codegen_flags: <defaults>
</compile_context>

<pallas_src>
import functools

import jax
import jax.numpy as jnp
from jax.experimental import pallas as pl
from jax.experimental.pallas import tpu as pltpu

# Generous scoped-VMEM budget (>= default on v5e/v6e/v7x, far below physical);
# every block used below is much smaller than this.
_VMEM_LIMIT = 32 * 1024 * 1024


def _const_spec(arr):
    """Full-array BlockSpec whose block never moves across the (1-D) grid."""
    zeros = (0,) * arr.ndim
    return pl.BlockSpec(arr.shape, lambda b, _z=zeros: _z)


def _layernorm(v, g, b, eps=1e-5):
    """LayerNorm with f32 statistics (matches torch nn.LayerNorm, eps=1e-5)."""
    v = v.astype(jnp.float32)
    mu = jnp.mean(v, axis=-1, keepdims=True)
    var = jnp.mean((v - mu) ** 2, axis=-1, keepdims=True)
    return (v - mu) * jax.lax.rsqrt(var + eps) * g + b


# ----------------------------------------------------------------------------
# Kernel 1: fused patch embedding + CLS-token prepend + positional embedding
# ----------------------------------------------------------------------------
def _embed_kernel(p_ref, w_ref, b_ref, cls_ref, pos_ref, o_ref):
    # p_ref: (1, N, F)  w_ref: (F, D) bf16  b_ref/cls_ref: (1, D)  pos_ref: (S, D)
    patches = p_ref[0].astype(jnp.bfloat16)                       # (N, F)
    emb = jnp.dot(patches, w_ref[...],
                  preferred_element_type=jnp.float32) + b_ref[...]  # (N, D) f32
    tokens = jnp.concatenate([cls_ref[...], emb], axis=0)           # (S, D)
    o_ref[0] = (tokens + pos_ref[...]).astype(o_ref.dtype)          # lane-dense store


def embed_patches(patches, patch_w, patch_b, cls_token, pos_embed):
    B, N, F = patches.shape
    D = patch_w.shape[1]
    S = N + 1
    return pl.pallas_call(
        _embed_kernel,
        out_shape=jax.ShapeDtypeStruct((B, S, D), jnp.float32),
        grid=(B,),
        in_specs=[
            pl.BlockSpec((1, N, F), lambda b: (b, 0, 0)),
            _const_spec(patch_w),
            _const_spec(patch_b),
            _const_spec(cls_token),
            _const_spec(pos_embed),
        ],
        out_specs=pl.BlockSpec((1, S, D), lambda b: (b, 0, 0)),
        compiler_params=pltpu.CompilerParams(
            dimension_semantics=("parallel",),
            vmem_limit_bytes=_VMEM_LIMIT),
    )(patches, patch_w, patch_b, cls_token, pos_embed)


# ----------------------------------------------------------------------------
# Kernel 2: one full transformer encoder block (per batch element)
# ----------------------------------------------------------------------------
def _encoder_kernel(
    x_ref,
    ln1g_ref, ln1b_ref,
    wq_ref, bq_ref, wk_ref, bk_ref, wv_ref, bv_ref, wo_ref, bo_ref,
    ln2g_ref, ln2b_ref,
    w1_ref, b1_ref, w2_ref, b2_ref,
    o_ref,
    *, num_heads,
):
    f32 = jnp.float32
    bf16 = jnp.bfloat16

    x = x_ref[0].astype(f32)                 # (S, D) residual stream in f32
    S, D = x.shape
    H = num_heads
    hd = D // H
    scale = float(hd) ** -0.5

    # ---- Multi-head self-attention: heads batched in dot_general -----------
    h = _layernorm(x, ln1g_ref[...], ln1b_ref[...]).astype(bf16)   # (S, D)
    hb = jnp.broadcast_to(h, (H, S, D))                            # leading-dim bcast

    proj_dims = (((2,), (1,)), ((0,), (0,)))   # 'hsd,hdk->hsk'
    q = jax.lax.dot_general(hb, wq_ref[...], proj_dims,
                            preferred_element_type=f32) + bq_ref[...]   # (H,S,hd)
    k = jax.lax.dot_general(hb, wk_ref[...], proj_dims,
                            preferred_element_type=f32) + bk_ref[...]
    v = jax.lax.dot_general(hb, wv_ref[...], proj_dims,
                            preferred_element_type=f32) + bv_ref[...]

    # fold the 1/sqrt(hd) scale into q (cheaper than scaling the S*S scores)
    qh = (q * scale).astype(bf16)
    kh = k.astype(bf16)
    vh = v.astype(bf16)

    # scores: 'hqd,hkd->hqk'  (single batched MXU op, f32 accumulation)
    s = jax.lax.dot_general(qh, kh, (((2,), (2,)), ((0,), (0,))),
                            preferred_element_type=f32)            # (H,S,S)
    # softmax in f32; divide moved to the EUP via approx reciprocal
    s = s - jnp.max(s, axis=-1, keepdims=True)
    p = jnp.exp(s)
    p = p * pl.reciprocal(jnp.sum(p, axis=-1, keepdims=True), approx=True)

    # context: 'hqk,hkd->hqd'
    ctx = jax.lax.dot_general(p.astype(bf16), vh, (((2,), (1,)), ((0,), (0,))),
                              preferred_element_type=f32)          # (H,S,hd)

    # output projection per head + reduce over heads (== concat(heads) @ Wo)
    per_head = jax.lax.dot_general(ctx.astype(bf16), wo_ref[...],
                                   (((2,), (1,)), ((0,), (0,))),
                                   preferred_element_type=f32)     # (H,S,D)
    attn = jnp.sum(per_head, axis=0) + bo_ref[...]                 # (S,D) f32
    # TODO(synk): dropout is identity in eval mode; no RNG dropout emitted.
    x = x + attn

    # ---- MLP ----------------------------------------------------------------
    h2 = _layernorm(x, ln2g_ref[...], ln2b_ref[...]).astype(bf16)
    m = jnp.dot(h2, w1_ref[...], preferred_element_type=f32) + b1_ref[...]
    # tanh GELU (torch nn.GELU default is exact erf; tiny systematic drift)
    m = jax.nn.gelu(m, approximate=True).astype(bf16)
    m = jnp.dot(m, w2_ref[...], preferred_element_type=f32) + b2_ref[...]
    x = x + m

    o_ref[0] = x.astype(o_ref.dtype)


def encoder_block(x, p, num_heads):
    """x: (B, S, D) -> (B, S, D); grid over batch, parallel across TCs."""
    B, S, D = x.shape
    weights = [
        p["ln1_g"], p["ln1_b"],
        p["wq"], p["bq"], p["wk"], p["bk"], p["wv"], p["bv"], p["wo"], p["bo"],
        p["ln2_g"], p["ln2_b"],
        p["w1"], p["b1"], p["w2"], p["b2"],
    ]
    in_specs = [pl.BlockSpec((1, S, D), lambda b: (b, 0, 0))]
    in_specs += [_const_spec(w) for w in weights]

    return pl.pallas_call(
        functools.partial(_encoder_kernel, num_heads=num_heads),
        out_shape=jax.ShapeDtypeStruct((B, S, D), x.dtype),
        grid=(B,),
        in_specs=in_specs,
        out_specs=pl.BlockSpec((1, S, D), lambda b: (b, 0, 0)),
        compiler_params=pltpu.CompilerParams(
            dimension_semantics=("parallel",),
            vmem_limit_bytes=_VMEM_LIMIT),
    )(x, *weights)


# ----------------------------------------------------------------------------
# Kernel 3: classification head  (LN -> Linear -> GELU -> Linear) on CLS token
# ----------------------------------------------------------------------------
def _head_kernel(x_ref, lng_ref, lnb_ref, w1_ref, b1_ref, w2_ref, b2_ref, o_ref):
    f32 = jnp.float32
    h = _layernorm(x_ref[...], lng_ref[...], lnb_ref[...]).astype(jnp.bfloat16)
    h = jnp.dot(h, w1_ref[...], preferred_element_type=f32) + b1_ref[...]
    h = jax.nn.gelu(h, approximate=True).astype(jnp.bfloat16)
    h = jnp.dot(h, w2_ref[...], preferred_element_type=f32) + b2_ref[...]
    # num_classes < 128 -> final store is necessarily a masked partial store.
    o_ref[...] = h.astype(o_ref.dtype)


def classify_head(cls_tok, p):
    B, D = cls_tok.shape
    C = p["w2"].shape[1]
    weights = [p["ln_g"], p["ln_b"], p["w1"], p["b1"], p["w2"], p["b2"]]
    return pl.pallas_call(
        _head_kernel,
        out_shape=jax.ShapeDtypeStruct((B, C), jnp.float32),
        grid=(1,),
        in_specs=[_const_spec(cls_tok)] + [_const_spec(w) for w in weights],
        out_specs=pl.BlockSpec((B, C), lambda b: (0, 0)),
        compiler_params=pltpu.CompilerParams(
            dimension_semantics=("arbitrary",),
            vmem_limit_bytes=_VMEM_LIMIT),
    )(cls_tok, *weights)


# ----------------------------------------------------------------------------
# Parameter construction + full forward
# ----------------------------------------------------------------------------
def init_vit_params(key, num_layers, num_patches, input_dim, embedding_dim,
                    num_heads, attention_mlp_hidden, classify_mlp_hidden,
                    num_classes):
    D = embedding_dim
    H = num_heads
    hd = D // H
    assert hd * H == D, "embedding_dim must be divisible by num_heads"

    def nxt():
        nonlocal key
        key, sub = jax.random.split(key)
        return sub

    def wf32(shape, scale=0.02):
        return (scale * jax.random.normal(nxt(), shape)).astype(jnp.float32)

    def wbf16(shape, scale=0.02):
        # matmul weights live in bf16 (MXU fast path, half the HBM/VMEM bytes)
        return wf32(shape, scale).astype(jnp.bfloat16)

    def split_heads_in(w):   # (D, D) -> (H, D, hd): w_r[h, c, d] = w[c, h*hd + d]
        return jnp.transpose(w.reshape(D, H, hd), (1, 0, 2))

    def split_heads_out(w):  # (D, D) -> (H, hd, D): w_r[h, d, c] = w[h*hd + d, c]
        return w.reshape(H, hd, D)

    params = {
        "patch_w": wbf16((input_dim, D)),
        "patch_b": wf32((1, D)),
        "cls_token": wf32((1, D)),
        "pos_embed": wf32((num_patches + 1, D)),
        "layers": [],
        "head": {
            "ln_g": jnp.ones((1, D), jnp.float32),
            "ln_b": jnp.zeros((1, D), jnp.float32),
            "w1": wbf16((D, classify_mlp_hidden)),
            "b1": wf32((1, classify_mlp_hidden)),
            "w2": wbf16((classify_mlp_hidden, num_classes)),
            "b2": wf32((1, num_classes)),
        },
    }
    for _ in range(num_layers):
        wq, wk, wv, wo = (wbf16((D, D)) for _ in range(4))
        bq, bk, bv = (wf32((1, D)) for _ in range(3))
        params["layers"].append({
            "ln1_g": jnp.ones((1, D), jnp.float32),
            "ln1_b": jnp.zeros((1, D), jnp.float32),
            # attention weights pre-split per head so the kernel uses pure
            # batched dot_generals (no in-kernel lane reshape / transpose).
            "wq": split_heads_in(wq), "bq": bq.reshape(H, 1, hd),
            "wk": split_heads_in(wk), "bk": bk.reshape(H, 1, hd),
            "wv": split_heads_in(wv), "bv": bv.reshape(H, 1, hd),
            "wo": split_heads_out(wo), "bo": wf32((1, D)),
            "ln2_g": jnp.ones((1, D), jnp.float32),
            "ln2_b": jnp.zeros((1, D), jnp.float32),
            "w1": wbf16((D, attention_mlp_hidden)),
            "b1": wf32((1, attention_mlp_hidden)),
            "w2": wbf16((attention_mlp_hidden, D)),
            "b2": wf32((1, D)),
        })
    return params


def vit_forward(patches, params, num_heads):
    """patches: (B, N, input_dim) -> logits (B, num_classes)"""
    # Fused: patch linear embed + CLS prepend + positional embedding (1 kernel).
    x = embed_patches(patches, params["patch_w"], params["patch_b"],
                      params["cls_token"], params["pos_embed"])

    # Transformer encoder stack (each block is one fused Pallas kernel).
    for layer_params in params["layers"]:
        x = encoder_block(x, layer_params, num_heads)

    # Classification head on the CLS token (tiny plain-JAX row slice as glue).
    return classify_head(x[:, 0, :], params["head"])


if __name__ == "__main__":
    # Small, lane-friendly configuration (embedding_dim = 128 keeps every
    # activation / weight block 128-lane dense).
    B = 2
    num_layers = 2
    num_patches = 7          # N  -> sequence length S = N + 1 = 8
    input_dim = 48           # P^2 * C  (e.g. P = 4, C = 3)
    embedding_dim = 128
    num_heads = 4            # head_dim = 32
    dropout_rate = 0.0       # eval mode: identity
    attention_mlp_hidden = 256
    classify_mlp_hidden = 128
    num_classes = 10

    key = jax.random.PRNGKey(0)
    key_params, key_x = jax.random.split(key)

    params = init_vit_params(
        key_params, num_layers, num_patches, input_dim, embedding_dim,
        num_heads, attention_mlp_hidden, classify_mlp_hidden, num_classes,
    )
    patches = jax.random.normal(key_x, (B, num_patches, input_dim), jnp.float32)

    logits = vit_forward(patches, params, num_heads)
    logits = jax.block_until_ready(logits)
    assert logits.shape == (B, num_classes), logits.shape
    assert jnp.all(jnp.isfinite(logits))
    print("KERNEL_OK")
</pallas_src>

<mosaic_0001>
module attributes {stable_mosaic.version = 11 : i64} {
  func.func @_embed_kernel(%arg0: i32, %arg1: memref<1x7x48xf32, #tpu.memory_space<vmem>>, %arg2: memref<48x128xbf16, #tpu.memory_space<vmem>>, %arg3: memref<1x128xf32, #tpu.memory_space<vmem>>, %arg4: memref<1x128xf32, #tpu.memory_space<vmem>>, %arg5: memref<8x128xf32, #tpu.memory_space<vmem>>, %arg6: memref<1x8x128xf32, #tpu.memory_space<vmem>>) attributes {dimension_semantics = [#tpu.dimension_semantics<parallel>], iteration_bounds = array<i64: 2>, scalar_prefetch = 0 : i64, scratch_operands = 0 : i64, tpu.core_type = #tpu.core_type<tc>, window_params = [{transform_indices = @transform_0, window_bounds = array<i64: 1, 7, 48>}, {pipeline_mode = #tpu.pipeline_mode<synchronous>, transform_indices = @transform_1, window_bounds = array<i64: 48, 128>}, {pipeline_mode = #tpu.pipeline_mode<synchronous>, transform_indices = @transform_2, window_bounds = array<i64: 1, 128>}, {pipeline_mode = #tpu.pipeline_mode<synchronous>, transform_indices = @transform_3, window_bounds = array<i64: 1, 128>}, {pipeline_mode = #tpu.pipeline_mode<synchronous>, transform_indices = @transform_4, window_bounds = array<i64: 8, 128>}, {transform_indices = @transform_5, window_bounds = array<i64: 1, 8, 128>}]} {
    %c0 = arith.constant 0 : index
    %c0_0 = arith.constant 0 : index
    %c0_1 = arith.constant 0 : index
    %0 = vector.load %arg1[%c0, %c0_0, %c0_1] : memref<1x7x48xf32, #tpu.memory_space<vmem>>, vector<1x7x48xf32>
    %1 = vector.shape_cast %0 : vector<1x7x48xf32> to vector<7x48xf32>
    %2 = arith.truncf %1 : vector<7x48xf32> to vector<7x48xbf16>
    %c0_2 = arith.constant 0 : index
    %c0_3 = arith.constant 0 : index
    %3 = vector.load %arg2[%c0_2, %c0_3] : memref<48x128xbf16, #tpu.memory_space<vmem>>, vector<48x128xbf16>
    %cst = arith.constant dense<0.000000e+00> : vector<7x128xf32>
    %4 = tpu.matmul %2, %3, %cst {dimension_numbers = #tpu.dot_dimension_numbers<[1], [0], [0], [1], [0, 0, 1, 1], [], []>} : vector<7x48xbf16>, vector<48x128xbf16>, vector<7x128xf32> -> vector<7x128xf32>
    %c0_4 = arith.constant 0 : index
    %c0_5 = arith.constant 0 : index
    %5 = vector.load %arg3[%c0_4, %c0_5] : memref<1x128xf32, #tpu.memory_space<vmem>>, vector<1x128xf32>
    %6 = vector.broadcast %5 : vector<1x128xf32> to vector<7x128xf32>
    %7 = arith.addf %4, %6 : vector<7x128xf32>
    %c0_6 = arith.constant 0 : index
    %c0_7 = arith.constant 0 : index
    %8 = vector.load %arg4[%c0_6, %c0_7] : memref<1x128xf32, #tpu.memory_space<vmem>>, vector<1x128xf32>
    %9 = tpu.concatenate %8, %7 in 0 : vector<1x128xf32>, vector<7x128xf32> -> vector<8x128xf32>
    %c0_8 = arith.constant 0 : index
    %c0_9 = arith.constant 0 : index
    %10 = vector.load %arg5[%c0_8, %c0_9] : memref<8x128xf32, #tpu.memory_space<vmem>>, vector<8x128xf32>
    %11 = arith.addf %9, %10 : vector<8x128xf32>
    %c0_10 = arith.constant 0 : index
    %c0_11 = arith.constant 0 : index
    %c0_12 = arith.constant 0 : index
    %12 = vector.load %arg6[%c0_10, %c0_11, %c0_12] : memref<1x8x128xf32, #tpu.memory_space<vmem>>, vector<1x8x128xf32>
    %13 = vector.shape_cast %12 : vector<1x8x128xf32> to vector<8x128xf32>
    %14 = vector.shape_cast %11 : vector<8x128xf32> to vector<1x8x128xf32>
    tpu.vector_store %arg6[%c0_10, %c0_11, %c0_12], %14 {strides = array<i32>} : memref<1x8x128xf32, #tpu.memory_space<vmem>>, vector<1x8x128xf32>,
    return
  }
  func.func @transform_0(%arg0: i32) -> (i32, i32, i32) {
    %c0_i32 = arith.constant 0 : i32
    %c0_i32_0 = arith.constant 0 : i32
    %c0_i32_1 = arith.constant 0 : i32
    return %arg0, %c0_i32, %c0_i32_0 : i32, i32, i32
  }
  func.func @transform_1(%arg0: i32) -> (i32, i32) {
    %c0_i32 = arith.constant 0 : i32
    %c0_i32_0 = arith.constant 0 : i32
    %c0_i32_1 = arith.constant 0 : i32
    return %c0_i32, %c0_i32_0 : i32, i32
  }
  func.func @transform_2(%arg0: i32) -> (i32, i32) {
    %c0_i32 = arith.constant 0 : i32
    %c0_i32_0 = arith.constant 0 : i32
    %c0_i32_1 = arith.constant 0 : i32
    return %c0_i32, %c0_i32_0 : i32, i32
  }
  func.func @transform_3(%arg0: i32) -> (i32, i32) {
    %c0_i32 = arith.constant 0 : i32
    %c0_i32_0 = arith.constant 0 : i32
    %c0_i32_1 = arith.constant 0 : i32
    return %c0_i32, %c0_i32_0 : i32, i32
  }
  func.func @transform_4(%arg0: i32) -> (i32, i32) {
    %c0_i32 = arith.constant 0 : i32
    %c0_i32_0 = arith.constant 0 : i32
    %c0_i32_1 = arith.constant 0 : i32
    return %c0_i32, %c0_i32_0 : i32, i32
  }
  func.func @transform_5(%arg0: i32) -> (i32, i32, i32) {
    %c0_i32 = arith.constant 0 : i32
    %c0_i32_0 = arith.constant 0 : i32
    %c0_i32_1 = arith.constant 0 : i32
    return %arg0, %c0_i32, %c0_i32_0 : i32, i32, i32
  }
}

</mosaic_0001>

<llo_original>
// kernel: tpu_custom_call.1
$region0: #{tpu_custom_call.1}
  #allocation0 [shape = 'u32[]', space=smem, size = 0x4, offset = 0x4, fixed_abs, tag = 'smem constant byte address 0x4 - core index']
  #allocation1 [shape = 'u32[144,128]{1,0:T(1,128)}', space=vmem, size = 0x12000, scoped, tag = 'internal scratch']
  %s0 = inlined_call_operand.vmem [shape: f32[2,7,48], index: 0, kind: input, shape index: {}]
  %s1 = inlined_call_operand.vmem [shape: bf16[48,128], index: 1, kind: input, shape index: {}]
  %s2 = inlined_call_operand.vmem [shape: f32[1,128], index: 2, kind: input, shape index: {}]
  %s3 = inlined_call_operand.vmem [shape: f32[1,128], index: 3, kind: input, shape index: {}]
  %s4 = inlined_call_operand.vmem [shape: f32[8,128], index: 4, kind: input, shape index: {}]
  %s5 = inlined_call_operand.hbm [shape: f32[2,8,128], index: 5, kind: output, shape index: {}]
  %s6 = sld [smem:[#allocation0]]
  $region53: #{tpu_custom_call.1} parent=0
    _
  %s8 = ssub.s32 1, %s6
  %s9 = scalar_select 0, %s8, %s6
  $region1: #{tpu_custom_call.1} parent=0
    #allocation2 [shape = 'u8[8192]{0}', space=vmem, size = 0x2000, scoped, tag = 'output window, operand 0']
    #allocation3 [shape = 's32[2]{0}', space=sflag, size = 0x8, scoped, tag = 'scoped memory for tpu_custom_call.1']
    %10 = vsyncpa [#allocation3], 0
    %s11 = scalar_lea.sflag [#allocation3], 1
    %12 = vsyncpa %s11, 0
    loop: start=0, step=1, limit=4
    $region2: #{tpu_custom_call.1} parent=1 // loop_pre_header
      _
    $region3: #{tpu_custom_call.1} parent=1 // loop_header
      %s14 = sphi 0, %s18
      %p15 = scmp.ge.s32.totalorder %s14, 4
      %s24 = sphi 0, %s26
      %s27 = sphi 0, %s24
      %s28 = sphi 0, %s27
      %s44 = sphi 0, %s28
      %s48 = sphi 0, %s48
      %s50 = sphi 0, %s48
      %s51 = sphi 0, %s50
      %s65 = sphi 0, %s51
      %s69 = sphi 0, %s69
      %s71 = sphi 0, %s69
      %s72 = sphi 0, %s71
      %s86 = sphi 0, %s72
      %s90 = sphi 0, %s90
      %s92 = sphi 0, %s90
      %s93 = sphi 0, %s92
      %s107 = sphi 0, %s93
      %s111 = sphi 0, %s111
      %s113 = sphi 0, %s111
      %s114 = sphi 0, %s113
      %s128 = sphi 0, %s114
      %s134 = sphi 0, %s136
      %s137 = sphi 0, %s134
      %s138 = sphi 0, %s137
      %s154 = sphi 0, %s138
    $region4: #{tpu_custom_call.1} parent=1 // loop_header_branch
      %17 = sbr.rel (%p15) target = $region8
    $region5: #{tpu_custom_call.1} parent=1 // loop_body
      %s19 = ssub.s32 %s14, 1
      %s20 = ssub.s32 %s14, 2
      %s21 = sadd.s32 %s14, 1
      %s22 = ssub.s32 %s14, %s21
      %p23 = scmp.eq.s32.totalorder %s22, 0
      %s25 = sadd.s32 %s24, 1
      %s26 = scalar_select %p23, %s24, %s25
      %p29 = pneg %p23
      %p30 = scmp.eq.s32.totalorder %s14, 1
      %p31 = por %p29, %p30
      %p32 = scmp.ne.s32.totalorder %s24, %s27
      %p33 = scmp.eq.s32.totalorder %s14, 0
      %p34 = por %p32, %p33
      %p35 = scmp.ne.s32.totalorder %s24, %s27
      %p36 = scmp.eq.s32.totalorder %s19, 1
      %p37 = por %p35, %p36
      %p38 = scmp.ne.s32.totalorder %s27, %s28
      %p39 = scmp.eq.s32.totalorder %s19, 0
      %p40 = por %p38, %p39
      %p41 = scmp.ne.s32.totalorder %s27, %s28
      %p42 = scmp.eq.s32.totalorder %s20, 1
      %p43 = por %p41, %p42
      %p45 = scmp.ne.s32.totalorder %s28, %s44
      %p46 = scmp.eq.s32.totalorder %s20, 0
      %p47 = por %p45, %p46
      %s49 = sadd.s32 %s48, 1
      %p52 = scmp.eq.s32.totalorder %s14, 1
      %p53 = scmp.ne.s32.totalorder %s48, %s50
      %p54 = scmp.eq.s32.totalorder %s14, 0
      %p55 = por %p53, %p54
      %p56 = scmp.ne.s32.totalorder %s48, %s50
      %p57 = scmp.eq.s32.totalorder %s19, 1
      %p58 = por %p56, %p57
      %p59 = scmp.ne.s32.totalorder %s50, %s51
      %p60 = scmp.eq.s32.totalorder %s19, 0
      %p61 = por %p59, %p60
      %p62 = scmp.ne.s32.totalorder %s50, %s51
      %p63 = scmp.eq.s32.totalorder %s20, 1
      %p64 = por %p62, %p63
      %p66 = scmp.ne.s32.totalorder %s51, %s65
      %p67 = scmp.eq.s32.totalorder %s20, 0
      %p68 = por %p66, %p67
      %s70 = sadd.s32 %s69, 1
      %p73 = scmp.eq.s32.totalorder %s14, 1
      %p74 = scmp.ne.s32.totalorder %s69, %s71
      %p75 = scmp.eq.s32.totalorder %s14, 0
      %p76 = por %p74, %p75
      %p77 = scmp.ne.s32.totalorder %s69, %s71
      %p78 = scmp.eq.s32.totalorder %s19, 1
      %p79 = por %p77, %p78
      %p80 = scmp.ne.s32.totalorder %s71, %s72
      %p81 = scmp.eq.s32.totalorder %s19, 0
      %p82 = por %p80, %p81
      %p83 = scmp.ne.s32.totalorder %s71, %s72
      %p84 = scmp.eq.s32.totalorder %s20, 1
      %p85 = por %p83, %p84
      %p87 = scmp.ne.s32.totalorder %s72, %s86
      %p88 = scmp.eq.s32.totalorder %s20, 0
      %p89 = por %p87, %p88
      %s91 = sadd.s32 %s90, 1
      %p94 = scmp.eq.s32.totalorder %s14, 1
      %p95 = scmp.ne.s32.totalorder %s90, %s92
      %p96 = scmp.eq.s32.totalorder %s14, 0
      %p97 = por %p95, %p96
      %p98 = scmp.ne.s32.totalorder %s90, %s92
      %p99 = scmp.eq.s32.totalorder %s19, 1
      %p100 = por %p98, %p99
      %p101 = scmp.ne.s32.totalorder %s92, %s93
      %p102 = scmp.eq.s32.totalorder %s19, 0
      %p103 = por %p101, %p102
      %p104 = scmp.ne.s32.totalorder %s92, %s93
      %p105 = scmp.eq.s32.totalorder %s20, 1
      %p106 = por %p104, %p105
      %p108 = scmp.ne.s32.totalorder %s93, %s107
      %p109 = scmp.eq.s32.totalorder %s20, 0
      %p110 = por %p108, %p109
      %s112 = sadd.s32 %s111, 1
      %p115 = scmp.eq.s32.totalorder %s14, 1
      %p116 = scmp.ne.s32.totalorder %s111, %s113
      %p117 = scmp.eq.s32.totalorder %s14, 0
      %p118 = por %p116, %p117
      %p119 = scmp.ne.s32.totalorder %s111, %s113
      %p120 = scmp.eq.s32.totalorder %s19, 1
      %p121 = por %p119, %p120
      %p122 = scmp.ne.s32.totalorder %s113, %s114
      %p123 = scmp.eq.s32.totalorder %s19, 0
      %p124 = por %p122, %p123
      %p125 = scmp.ne.s32.totalorder %s113, %s114
      %p126 = scmp.eq.s32.totalorder %s20, 1
      %p127 = por %p125, %p126
      %p129 = scmp.ne.s32.totalorder %s114, %s128
      %p130 = scmp.eq.s32.totalorder %s20, 0
      %p131 = por %p129, %p130
      %s132 = ssub.s32 %s14, %s21
      %p133 = scmp.eq.s32.totalorder %s132, 0
      %s135 = sadd.s32 %s134, 1
      %s136 = scalar_select %p133, %s134, %s135
      %p139 = pneg %p133
      %p140 = scmp.eq.s32.totalorder %s14, 1
      %p141 = por %p139, %p140
      %p142 = scmp.ne.s32.totalorder %s134, %s137
      %p143 = scmp.eq.s32.totalorder %s14, 0
      %p144 = por %p142, %p143
      %p145 = scmp.ne.s32.totalorder %s134, %s137
      %p146 = scmp.eq.s32.totalorder %s19, 1
      %p147 = por %p145, %p146
      %p148 = scmp.ne.s32.totalorder %s137, %s138
      %p149 = scmp.eq.s32.totalorder %s19, 0
      %p150 = por %p148, %p149
      %p151 = scmp.ne.s32.totalorder %s137, %s138
      %p152 = scmp.eq.s32.totalorder %s20, 1
      %p153 = por %p151, %p152
      %p155 = scmp.ne.s32.totalorder %s138, %s154
      %p156 = scmp.eq.s32.totalorder %s20, 0
      %p157 = por %p155, %p156
      %p158 = scmp.le.s32.totalorder 1, %s14
      %p159 = scmp.lt.s32.totalorder %s14, 3
      %p160 = pnand %p158, %p159
      %p161 = pneg %p160
      // Predicated region
      $region9: #{tpu_custom_call.1} parent=5 // pred_check
        _
      $region10: #{tpu_custom_call.1} parent=5 // pred_check_branch
        %163 = sbr.rel (%p160) target = $region12
      $region11: #{tpu_custom_call.1} parent=5 // pred_region
        %s164 = ssub.s32 %s14, 1
        // Predicated region
        $region13: #{tpu_custom_call.1} parent=11 // pred_check
          %p165 = pneg %p61
        $region14: #{tpu_custom_call.1} parent=11 // pred_check_branch
          %167 = sbr.rel (%p165) target = $region16
        $region15: #{tpu_custom_call.1} parent=11 // pred_region
          _
        $region16: #{tpu_custom_call.1} parent=11 // pred_fallthru
          _
        // Predicated region
        $region17: #{tpu_custom_call.1} parent=11 // pred_check
          %p168 = pneg %p82
        $region18: #{tpu_custom_call.1} parent=11 // pred_check_branch
          %170 = sbr.rel (%p168) target = $region20
        $region19: #{tpu_custom_call.1} parent=11 // pred_region
          _
        $region20: #{tpu_custom_call.1} parent=11 // pred_fallthru
          _
        // Predicated region
        $region21: #{tpu_custom_call.1} parent=11 // pred_check
          %p171 = pneg %p103
        $region22: #{tpu_custom_call.1} parent=11 // pred_check_branch
          %173 = sbr.rel (%p171) target = $region24
        $region23: #{tpu_custom_call.1} parent=11 // pred_region
          _
        $region24: #{tpu_custom_call.1} parent=11 // pred_fallthru
          _
        // Predicated region
        $region25: #{tpu_custom_call.1} parent=11 // pred_check
          %p174 = pneg %p124
        $region26: #{tpu_custom_call.1} parent=11 // pred_check_branch
          %176 = sbr.rel (%p174) target = $region28
        $region27: #{tpu_custom_call.1} parent=11 // pred_region
          _
        $region28: #{tpu_custom_call.1} parent=11 // pred_fallthru
          _
      $region12: #{tpu_custom_call.1} parent=5 // pred_fallthru
        _
      %p177 = scmp.lt.s32.totalorder %s14, 2
      // Predicated region
      $region29: #{tpu_custom_call.1} parent=5 // pred_check
        %p178 = pneg %p177
      $region30: #{tpu_custom_call.1} parent=5 // pred_check_branch
        %180 = sbr.rel (%p178) target = $region32
      $region31: #{tpu_custom_call.1} parent=5 // pred_region
        // Predicated region
        $region33: #{tpu_custom_call.1} parent=31 // pred_check
          %p181 = pneg %p34
        $region34: #{tpu_custom_call.1} parent=31 // pred_check_branch
          %183 = sbr.rel (%p181) target = $region36
        $region35: #{tpu_custom_call.1} parent=31 // pred_region
          %p184 = scmp.lt.s32.totalorder %s14, 1
          %s185 = scalar_select %p184, %s14, 1
          %s186 = smul.addr %s185, 8
          %s187 = scalar_lea.vmem %s0, %s186
        $region36: #{tpu_custom_call.1} parent=31 // pred_fallthru
          _
      $region32: #{tpu_custom_call.1} parent=5 // pred_fallthru
        _
      %p188 = scmp.le.s32.totalorder 1, %s14
      %p189 = scmp.lt.s32.totalorder %s14, 3
      %p190 = pnand %p188, %p189
      %p191 = pneg %p190
      // Predicated region
      $region37: #{tpu_custom_call.1} parent=5 // pred_check
        _
      $region38: #{tpu_custom_call.1} parent=5 // pred_check_branch
        %193 = sbr.rel (%p190) target = $region40
      $region39: #{tpu_custom_call.1} parent=5 // pred_region
        %s194 = ssub.s32 %s14, 1
        %p195 = scmp.lt.s32.totalorder %s19, 1
        %s196 = scalar_select %p195, %s19, 1
        %s197 = smul.addr %s196, 8
        %s198 = scalar_lea.vmem %s0, %s197
        %p199 = pneg %p40
        %p200 = pneg %p37
        %p201 = pneg %p61
        %p202 = pneg %p58
        %p203 = pneg %p82
        %p204 = pneg %p79
        %p205 = pneg %p103
        %p206 = pneg %p100
        %p207 = pneg %p124
        %p208 = pneg %p121
        %p209 = pneg %p150
        %p210 = pneg %p147
        %s211 = sand.u32 %s137, 1
        %s212 = scalar_lea.sflag [#allocation3], %s211
        %s213 = sand.u32 %s137, 1
        %s214 = smul.addr %s213, 8
        %s215 = scalar_lea.vmem [#allocation2], %s214
        %p216 = scmp.lt.s32.totalorder %s19, 1
        %s217 = scalar_select %p216, %s19, 1
        %s218 = smul.addr %s217, 8
        %s219 = scalar_lea.vmem %s0, %s218
        %v221 = vld [vmem:[%s219] sm:$0x7f]
        %v222 = vpack.c.bf16 %v221, %v221
        %v223 = vld [vmem:[%s1] sm:$0xf]
        %v224 = vld [vmem:[%s1 + $0x4] sm:$0xf]
        %v225 = vld [vmem:[%s1 + $0x8] sm:$0xf]
        %v226 = vld [vmem:[%s1 + $0xc] sm:$0xf]
        %v227 = vld [vmem:[%s1 + $0x10] sm:$0xf]
        %v228 = vld [vmem:[%s1 + $0x14] sm:$0xf]
        %v229 = vld [vmem:[%s2] sm:$0x1]
        %v231 = vlaneseq
        %v232 = vshrl.u32 %v231, 7
        %v233 = vsub.s32 0, %v232
        %v234 = vrot.slane %v229, %v233
        %v242 = vunpack.c.l.b16 %v223
        %v243 = vunpack.c.l.b16 %v224
        %v244 = vunpack.c.l.b16 %v225
        %v245 = vunpack.c.l.b16 %v226
        %v246 = vunpack.c.l.b16 %v227
        %v247 = vunpack.c.l.b16 %v228
        %v248 = vpack.c.b16 %v243, %v242
        %v249 = vpack.c.b16 %v245, %v244
        %v250 = vpack.c.b16 %v247, %v246
        %vm254 = vcmask 392192
        %v256 = vsel %vm254, %v222, 0
        %258 = vmatprep.subr.bf16.mxu0 0
        %259 = vmatpush1.bf16.msra.mxu0 0
        %260 = vmatprep.subr.bf16.mxu0 0
        %261 = vmatpush1.bf16.msra.mxu0 0
        %262 = vmatprep.subr.bf16.mxu0 0
        %263 = vmatpush1.bf16.msra.mxu0 0
        %264 = vmatprep.subr.bf16.mxu0 0
        %265 = vmatpush1.bf16.msra.mxu0 0
        %266 = vmatprep.subr.bf16.mxu0 0
        %267 = vmatpush1.bf16.msra.mxu0 0
        %268 = vmatprep.subr.bf16.mxu0 0
        %269 = vmatpush1.bf16.msra.mxu0 %v250
        %270 = vmatprep.subr.bf16.mxu0 0
        %271 = vmatpush1.bf16.msra.mxu0 %v249
        %272 = vmatprep.subr.bf16.mxu0 0
        %273 = vmatpush1.bf16.msra.mxu0 %v248
        %274 = vmatprep.subr.bf16.mxu0 0
        %275 = vmatpush2.bf16.msra.mxu0 0
        %276 = vmatprep.subr.bf16.mxu0 0
        %277 = vmatpush2.bf16.msra.mxu0 0
        %278 = vmatprep.subr.bf16.mxu0 0
        %279 = vmatpush2.bf16.msra.mxu0 0
        %280 = vmatprep.subr.bf16.mxu0 0
        %281 = vmatpush2.bf16.msra.mxu0 0
        %282 = vmatprep.subr.bf16.mxu0 0
        %283 = vmatpush2.bf16.msra.mxu0 0
        %284 = vmatprep.subr.bf16.mxu0 0
        %285 = vmatpush2.bf16.msra.mxu0 0
        %286 = vmatprep.subr.bf16.mxu0 0
        %287 = vmatpush2.bf16.msra.mxu0 0
        %288 = vmatprep.subr.bf16.mxu0 0
        %289 = vmatpush2.bf16.msra.mxu0 0
        %290 = vmatprep.mubr.bf16.mxu0 0
        %291 = vmatmul.mubr.bf16.gmra.mxu0 %v256
        %v292 = vpop.f32.mrf.mxu0
        %v293 = vadd.f32 %v234, %v292
        %v294 = vpop.f32.mrf.mxu0
        %v295 = vpop.f32.mrf.mxu0
        %v296 = vpop.f32.mrf.mxu0
        %297 = vdwg.mxu0
        %v298 = vld [vmem:[%s3] sm:$0x1]
        %v300 = vrot.slane %v293, 7
        %vm302 = vcmask 1040384
        %v303 = vsel %vm302, %v298, %v300
        %v304 = vld [vmem:[%s4] sm:$0xff]
        %v305 = vadd.f32 %v303, %v304
        %306 = vst [vmem:[%s215] sm:$0xff] %v305
        %s307 = sand.u32 %s137, 1
        %s308 = scalar_lea.sflag [#allocation3], %s307
        %s309 = sand.u32 %s137, 1
        %s310 = smul.addr %s309, 8
        %s311 = scalar_lea.vmem [#allocation2], %s310
        // Predicated region
        $region41: #{tpu_custom_call.1} parent=39 // pred_check
          %p312 = pneg %p147
        $region42: #{tpu_custom_call.1} parent=39 // pred_check_branch
          %314 = sbr.rel (%p312) target = $region44
        $region43: #{tpu_custom_call.1} parent=39 // pred_region
          %s316 = ssub.s32 128, 128
          %317 = vsyncadd %s308, %s316
          %s318 = smul.addr %s19, 128
          %s319 = scalar_lea.hbm %s5, %s318
          %s321 = sshll.u32 %s311, 4
          %s322 = int_to_ptr.vmem [resolvable:$true] %s321
          %324 = dma.vmem_to_hbm [thread:$0]  %s322, 128, %s319, %s308
        $region44: #{tpu_custom_call.1} parent=39 // pred_fallthru
          _
      $region40: #{tpu_custom_call.1} parent=5 // pred_fallthru
        _
      %p325 = scmp.le.s32.totalorder 2, %s14
      // Predicated region
      $region45: #{tpu_custom_call.1} parent=5 // pred_check
        %p326 = pneg %p325
      $region46: #{tpu_custom_call.1} parent=5 // pred_check_branch
        %328 = sbr.rel (%p326) target = $region48
      $region47: #{tpu_custom_call.1} parent=5 // pred_region
        %s329 = ssub.s32 %s14, 2
        // Predicated region
        $region49: #{tpu_custom_call.1} parent=47 // pred_check
          %p330 = pneg %p153
        $region50: #{tpu_custom_call.1} parent=47 // pred_check_branch
          %332 = sbr.rel (%p330) target = $region52
        $region51: #{tpu_custom_call.1} parent=47 // pred_region
          %s333 = sand.u32 %s138, 1
          %s334 = scalar_lea.sflag [#allocation3], %s333
          %s335 = sand.u32 %s138, 1
          %s336 = smul.addr %s335, 8
          %s337 = scalar_lea.vmem [#allocation2], %s336
          %338 = dma.done %s334, 128
        $region52: #{tpu_custom_call.1} parent=47 // pred_fallthru
          _
      $region48: #{tpu_custom_call.1} parent=5 // pred_fallthru
        _
    $region6: #{tpu_custom_call.1} parent=1 // loop_footer
      %s18 = sadd.s32 1, %s14
    $region7: #{tpu_custom_call.1} parent=1 // loop_footer_branch
      %13 = sbr.rel target = $region3
    $region8: #{tpu_custom_call.1} parent=1 // loop_exit
      _
    %339 = vsyncpa [#allocation3], 1
    %s340 = scalar_lea.sflag [#allocation3], 1
    %341 = vsyncpa %s340, 1

</llo_original>
